<compile_context>
chip_gen: v7x
topology: tpu7x:2x2x1
jax: 0.10.0
libtpu: 0.0.40
codegen_flags: <defaults>
</compile_context>

<pallas_src>
import functools

import jax
import jax.numpy as jnp
from jax.experimental import pallas as pl
from jax.experimental.pallas import tpu as pltpu


_CHUNK_THRESHOLD_BYTES = 4 * 1024 * 1024   # split the DMA above ~4 MiB of output
_MAX_CHUNKS = 8


def _make_slice_dma_kernel(out_rows: int, num_chunks: int):
    """Kernel: `num_chunks` HBM->HBM DMAs covering rows [start, start+out_rows).

    `start` arrives as a scalar-prefetch SMEM ref; chunk boundaries over the
    output rows are static.
    """
    bounds = [(c * out_rows) // num_chunks for c in range(num_chunks + 1)]

    def kernel(start_ref, x_hbm_ref, o_hbm_ref, copy_sems):
        start = start_ref[0]
        copies = []
        # Issue every DMA descriptor first (multiple outstanding copies hide
        # per-DMA issue latency), then wait for them all.
        for c in range(num_chunks):
            r0 = bounds[c]
            nr = bounds[c + 1] - r0
            cp = pltpu.make_async_copy(
                x_hbm_ref.at[pl.ds(start + r0, nr), :],   # dynamic src offset
                o_hbm_ref.at[pl.ds(r0, nr), :],           # static dst offset
                copy_sems.at[c],
            )
            cp.start()
            copies.append(cp)
        for cp in copies:
            cp.wait()

    return kernel


@functools.lru_cache(maxsize=None)
def _build_slice_call(rows: int, cols: int, dtype_name: str,
                      out_rows: int, num_chunks: int):
    """One jitted pallas_call per (shape, dtype, out_rows, num_chunks)."""
    dtype = jnp.dtype(dtype_name)
    itemsize = dtype.itemsize

    call = pl.pallas_call(
        _make_slice_dma_kernel(out_rows, num_chunks),
        out_shape=jax.ShapeDtypeStruct((out_rows, cols), dtype),
        grid_spec=pltpu.PrefetchScalarGridSpec(
            num_scalar_prefetch=1,                     # `start` -> SMEM
            grid=(1,),
            # Keep both operands in HBM; the kernel moves bytes with DMAs only.
            in_specs=[pl.BlockSpec(memory_space=pl.ANY)],
            out_specs=pl.BlockSpec(memory_space=pl.ANY),
            scratch_shapes=[pltpu.SemaphoreType.DMA((num_chunks,))],
        ),
        compiler_params=pltpu.CompilerParams(
            dimension_semantics=("arbitrary",),
        ),
        cost_estimate=pl.CostEstimate(
            flops=0,
            transcendentals=0,
            bytes_accessed=2 * out_rows * cols * itemsize,  # read + write
        ),
    )
    return jax.jit(call)


def slice_rows(x: jax.Array, start: int, stop: int, *, num_chunks=None) -> jax.Array:
    """Pallas equivalent of `x[start:stop, :]` for a 2D array."""
    rows, cols = x.shape

    # Resolve python-slice semantics (negative indices, clamping) like PyTorch.
    start_n = start if start >= 0 else rows + start
    stop_n = stop if stop >= 0 else rows + stop
    start_n = max(0, min(rows, start_n))
    stop_n = max(0, min(rows, stop_n))
    out_rows = max(0, stop_n - start_n)

    # Guard the degenerate empty slice (zero-size DMAs don't lower cleanly).
    if out_rows == 0:
        return jnp.zeros((0, cols), dtype=x.dtype)

    dtype = jnp.dtype(x.dtype)
    if num_chunks is None:
        out_bytes = out_rows * cols * dtype.itemsize
        num_chunks = _MAX_CHUNKS if out_bytes >= _CHUNK_THRESHOLD_BYTES else 1
    num_chunks = max(1, min(int(num_chunks), out_rows))

    call = _build_slice_call(rows, cols, dtype.name, out_rows, num_chunks)
    start_arr = jnp.array([start_n], dtype=jnp.int32)
    return call(start_arr, x)


if __name__ == "__main__":
    key = jax.random.PRNGKey(0)

    # Small shape consistent with the module: 2D input, slice rows [2, 10).
    x = jax.random.normal(key, (16, 32), dtype=jnp.float32)
    start, stop = 2, 10

    out = jax.block_until_ready(slice_rows(x, start, stop))
    ref = x[start:stop, :]
    assert out.shape == ref.shape, (out.shape, ref.shape)
    assert jnp.allclose(out, ref), "slice mismatch"

    # Same out_rows, different offset: reuses the same compiled kernel
    # (start is a scalar-prefetch argument, not a baked-in constant).
    out2 = jax.block_until_ready(slice_rows(x, 3, 11))
    assert jnp.allclose(out2, x[3:11, :]), "offset-reuse slice mismatch"

    # Negative-index slice semantics.
    out3 = jax.block_until_ready(slice_rows(x, -6, -1))
    assert jnp.allclose(out3, x[-6:-1, :]), "negative-index slice mismatch"

    # Exercise the chunked multi-DMA path (forced, on a modest array).
    xl = jax.random.normal(jax.random.PRNGKey(1), (512, 256), dtype=jnp.float32)
    out4 = jax.block_until_ready(slice_rows(xl, 37, 421, num_chunks=4))
    assert jnp.allclose(out4, xl[37:421, :]), "chunked slice mismatch"

    # Empty-slice guard.
    empty = slice_rows(x, 10, 10)
    assert empty.shape == (0, 32)

    print("KERNEL_OK")
</pallas_src>

<mosaic_0001>
module attributes {stable_mosaic.version = 11 : i64} {
  func.func @kernel(%arg0: i32, %arg1: memref<1xi32, #tpu.memory_space<smem>>, %arg2: memref<16x32xf32, #tpu.memory_space<any>>, %arg3: memref<8x32xf32, #tpu.memory_space<any>>, %arg4: memref<1x!tpu.dma_semaphore, #tpu.memory_space<semaphore_mem>>) attributes {dimension_semantics = [#tpu.dimension_semantics<arbitrary>], iteration_bounds = array<i64: 1>, scalar_prefetch = 1 : i64, scratch_operands = 1 : i64, tpu.core_type = #tpu.core_type<tc>, window_params = [{}, {}]} {
    %c0 = arith.constant 0 : index
    %0 = memref.load %arg1[%c0] : memref<1xi32, #tpu.memory_space<smem>>
    %c0_i32 = arith.constant 0 : i32
    %1 = arith.addi %0, %c0_i32 : i32
    %c0_i32_0 = arith.constant 0 : i32
    %c0_i32_1 = arith.constant 0 : i32
    %2 = tpu.memref_slice %arg2[%1, %c0_i32_1] : memref<16x32xf32, #tpu.memory_space<any>> -> memref<8x32xf32, #tpu.memory_space<any>>
    %c0_i32_2 = arith.constant 0 : i32
    %c0_i32_3 = arith.constant 0 : i32
    %3 = tpu.memref_slice %arg3[%c0_i32_2, %c0_i32_3] : memref<8x32xf32, #tpu.memory_space<any>> -> memref<8x32xf32, #tpu.memory_space<any>>
    %4 = tpu.memref_slice %arg4[%c0_i32_0] : memref<1x!tpu.dma_semaphore, #tpu.memory_space<semaphore_mem>> -> memref<1x!tpu.dma_semaphore, #tpu.memory_space<semaphore_mem>>
    %5 = tpu.memref_squeeze %4 : memref<1x!tpu.dma_semaphore, #tpu.memory_space<semaphore_mem>> -> memref<!tpu.dma_semaphore, #tpu.memory_space<semaphore_mem>>
    tpu.enqueue_dma source(%2 : memref<8x32xf32, #tpu.memory_space<any>>) target(%3 : memref<8x32xf32, #tpu.memory_space<any>>) target_semaphore(%5 : memref<!tpu.dma_semaphore, #tpu.memory_space<semaphore_mem>>)
    %c0_i32_4 = arith.constant 0 : i32
    %c0_i32_5 = arith.constant 0 : i32
    %6 = tpu.memref_slice %arg2[%1, %c0_i32_5] : memref<16x32xf32, #tpu.memory_space<any>> -> memref<8x32xf32, #tpu.memory_space<any>>
    %c0_i32_6 = arith.constant 0 : i32
    %c0_i32_7 = arith.constant 0 : i32
    %7 = tpu.memref_slice %arg3[%c0_i32_6, %c0_i32_7] : memref<8x32xf32, #tpu.memory_space<any>> -> memref<8x32xf32, #tpu.memory_space<any>>
    %8 = tpu.memref_slice %arg4[%c0_i32_4] : memref<1x!tpu.dma_semaphore, #tpu.memory_space<semaphore_mem>> -> memref<1x!tpu.dma_semaphore, #tpu.memory_space<semaphore_mem>>
    %9 = tpu.memref_squeeze %8 : memref<1x!tpu.dma_semaphore, #tpu.memory_space<semaphore_mem>> -> memref<!tpu.dma_semaphore, #tpu.memory_space<semaphore_mem>>
    tpu.wait_dma2 semaphore(%9 : memref<!tpu.dma_semaphore, #tpu.memory_space<semaphore_mem>>) src(%6 : memref<8x32xf32, #tpu.memory_space<any>>) dst(%7 : memref<8x32xf32, #tpu.memory_space<any>>)
    return
  }
}

</mosaic_0001>

<llo_original>
// kernel: tpu_custom_call.1
$region0: #{tpu_custom_call.1}
  #allocation0 [shape = 'u32[]', space=smem, size = 0x4, offset = 0x4, fixed_abs, tag = 'smem constant byte address 0x4 - core index']
  #allocation1 [shape = 'u32[144,128]{1,0:T(1,128)}', space=vmem, size = 0x12000, scoped, tag = 'internal scratch']
  #allocation2 [shape = 's32[1]{0}', space=sflag, size = 0x4, scoped, tag = 'scratch operand']
  #allocation3 [shape = 's32[1]{0}', space=sflag, size = 0x4, scoped, tag = 'scoped memory for tpu_custom_call.1']
  #allocation4 [shape = 's32[1]{0:T(128)S(6)}', space=smem, size = 0x200, scoped, tag = 'prefetched SMEM operand 0']
  #allocation5 [shape = 's32[]', space=sflag, size = 0x4, offset = 0, fixed_abs, tag = 'sflag constant byte address 0x0 - dummy sync flag']
  #allocation6 [shape = 'u32[0]{0}', space=smem, size = 0, offset = 0, fixed_abs, tag = 'smem constant byte address 0x0 - null']
  %s0 = inlined_call_operand.<no memory space> [shape: s32[1], index: 0, kind: input, shape index: {}]
  %s1 = inlined_call_operand.hbm [shape: f32[16,32], index: 1, kind: input, shape index: {}]
  %s2 = inlined_call_operand.hbm [shape: f32[8,32], index: 2, kind: output, shape index: {}]
  %s3 = sld [smem:[#allocation0]]
  $region2: #{tpu_custom_call.1} parent=0
    _
  %s5 = ssub.s32 1, %s3
  %s6 = scalar_select 0, %s5, %s3
  %7 = sst [smem:[#allocation4]] %s0
  %s8 = sld [smem:[#allocation4]]
  %s9 = smul.addr %s8, 16
  %s10 = scalar_lea.hbm %s1, %s9
  %s12 = sshll.u32 1, 14
  %s13 = sxor.u32 4294967295, %s12
  %s16 = sshll.u32 3, 24
  %s17 = sxor.u32 4294967295, %s16
  %s18 = sand.u32 0, %s17
  %s20 = sor.u32 %s18, 0
  %23 = dma.general %s10, 128, %s2, [#allocation2], [#allocation5], [#allocation6], %s20, 0
  %s24 = smul.u32 8, 1
  %s25 = sshll.u32 %s24, 4
  %26 = dma.done [#allocation2], %s25
  %27 = vsyncmov [#allocation2]
  %s28 = vpop.sfrf %27
  %p29 = scmp.eq.s32.totalorder %s28, 0
  %p30 = pneg %p29
  %32 = shalt.err (%p30)

</llo_original>
